<compile_context>
chip_gen: v7x
topology: tpu7x:2x2x1
jax: 0.10.0
libtpu: 0.0.40
codegen_flags: <defaults>
</compile_context>

<pallas_src>
import functools
import math

import jax
import jax.numpy as jnp
import numpy as np
from jax.experimental import pallas as pl
from jax.experimental.pallas import tpu as pltpu


# ---------------------------------------------------------------------------
# helpers
# ---------------------------------------------------------------------------
def _pick_tile(dim, target, mult=8):
    """Largest tile <= target that divides `dim` and is a multiple of `mult`;
    falls back to the full dim (always a legal 'full' block)."""
    if dim <= target:
        return dim
    t = (target // mult) * mult
    while t >= mult:
        if dim % t == 0:
            return t
        t -= mult
    return dim


def _attn_tile_target():
    """256-wide score tiles for the 256-deep MXU (v6e/v7x); 128 on v5e."""
    try:
        kind = jax.devices()[0].device_kind.lower()
    except Exception:  # pragma: no cover
        kind = ""
    if "v5 lite" in kind or "v5e" in kind or "v5litepod" in kind:
        return 128
    return 256


def _attn_vmem_bytes(num_heads, head_dim, embed_dim, tile):
    """Scoped-VMEM request sized from the actual attention-kernel footprint."""
    bf, f32 = 2, 4
    qkv_blocks = 3 * 2 * num_heads * tile * head_dim * bf        # double-buffered
    weights = 2 * (embed_dim * embed_dim * bf + embed_dim * f32)  # wproj + bproj
    out_block = 2 * tile * embed_dim * f32
    scratch = num_heads * tile * (head_dim + 2) * f32
    temps = 4 * num_heads * tile * tile * f32                     # score/exp temporaries
    total = qkv_blocks + weights + out_block + scratch + temps
    return int(min(max(2 * total, 16 * 1024 * 1024), 64 * 1024 * 1024))


# ---------------------------------------------------------------------------
# Kernel 1: student parameter generation (hypernetwork)
#   subset : (L, O, I)   (adjacent-teacher-layer axis first)
#   wl     : (L, 1)
#   W, B   : (O, I)
#   out    : (O, I) = tanh(sum_l subset[l] * wl[l]) * W + B
# Tiled over the O axis so real-model sizes stay within scoped VMEM.
# ---------------------------------------------------------------------------
def gen_param_kernel(subset_ref, wl_ref, W_ref, B_ref, out_ref):
    s = subset_ref[...]                           # (L, o_tile, I)
    wl = wl_ref[...]                              # (L, 1)
    acc = jnp.sum(s * wl[:, :, None], axis=0)     # (o_tile, I)
    out_ref[...] = jnp.tanh(acc) * W_ref[...] + B_ref[...]


def generate_student_param(subset_loi, wl, W_oi, B_oi, *, o_tile_target=256):
    L, O, I = subset_loi.shape
    ot = _pick_tile(O, o_tile_target)
    return pl.pallas_call(
        gen_param_kernel,
        grid=(O // ot,),
        in_specs=[
            pl.BlockSpec((L, ot, I), lambda i: (0, i, 0)),
            pl.BlockSpec((L, 1), lambda i: (0, 0)),
            pl.BlockSpec((ot, I), lambda i: (i, 0)),
            pl.BlockSpec((ot, I), lambda i: (i, 0)),
        ],
        out_specs=pl.BlockSpec((ot, I), lambda i: (i, 0)),
        out_shape=jax.ShapeDtypeStruct((O, I), jnp.float32),
        compiler_params=pltpu.CompilerParams(
            dimension_semantics=("parallel",)),
    )(subset_loi, wl, W_oi, B_oi)


# ---------------------------------------------------------------------------
# Kernel 2: fused QKV projection with head-major outputs
#   x tile (1, t, E)  @  Wqkv (E, 3E)  + b  ->  q/k/v blocks (1, H, t, D) bf16
#   The per-head split is done with static lane slices inside the kernel, so
#   no full-tensor transpose ever round-trips HBM.
# ---------------------------------------------------------------------------
def qkv_head_split_kernel(x_ref, w_ref, b_ref, q_ref, k_ref, v_ref, *,
                          num_heads, head_dim):
    x = x_ref[0]                                                     # (t, E)
    y = jnp.dot(x, w_ref[...], preferred_element_type=jnp.float32)
    y = (y + b_ref[...]).astype(q_ref.dtype)                         # (t, 3E) bf16
    e = num_heads * head_dim
    for h in range(num_heads):                                       # unrolled
        lo = h * head_dim
        q_ref[0, h] = y[:, lo:lo + head_dim]
        k_ref[0, h] = y[:, e + lo:e + lo + head_dim]
        v_ref[0, h] = y[:, 2 * e + lo:2 * e + lo + head_dim]


def qkv_projection_head_major(hidden_bf16, wqkv_t_bf16, bqkv_f32, *,
                              num_heads, head_dim, row_tile):
    B, T, E = hidden_bf16.shape
    three_e = wqkv_t_bf16.shape[1]
    kernel = functools.partial(qkv_head_split_kernel,
                               num_heads=num_heads, head_dim=head_dim)
    out_sds = jax.ShapeDtypeStruct((B, num_heads, T, head_dim), jnp.bfloat16)
    out_spec = pl.BlockSpec((1, num_heads, row_tile, head_dim),
                            lambda b, ti: (b, 0, ti, 0))
    return pl.pallas_call(
        kernel,
        grid=(B, T // row_tile),
        in_specs=[
            pl.BlockSpec((1, row_tile, E), lambda b, ti: (b, ti, 0)),
            pl.BlockSpec((E, three_e), lambda b, ti: (0, 0)),
            pl.BlockSpec((1, three_e), lambda b, ti: (0, 0)),
        ],
        out_specs=(out_spec, out_spec, out_spec),
        out_shape=(out_sds, out_sds, out_sds),
        compiler_params=pltpu.CompilerParams(
            dimension_semantics=("parallel", "parallel")),
    )(hidden_bf16, wqkv_t_bf16, bqkv_f32)


# ---------------------------------------------------------------------------
# Kernel 3: flash attention (online softmax over KV tiles, all heads batched)
#           with the output projection fused as a single E-deep matmul.
#   q,k,v  : (B, H, T, D)  bf16   (attention scale already folded into q)
#   wproj  : (E, E)        bf16   (c_proj.weight.T)
#   bproj  : (1, E)        f32
#   out    : (B, T, E)     f32
#   grid   : (B, n_q_tiles, n_kv_tiles), kv last + "arbitrary"
# ---------------------------------------------------------------------------
def flash_attn_proj_kernel(q_ref, k_ref, v_ref, wproj_ref, bproj_ref, out_ref,
                           m_sc, l_sc, acc_sc, *, num_heads, tq, tk):
    qi = pl.program_id(1)
    ki = pl.program_id(2)

    @pl.when(ki == 0)
    def _():
        m_sc[...] = jnp.full(m_sc.shape, -jnp.inf, m_sc.dtype)
        l_sc[...] = jnp.zeros(l_sc.shape, l_sc.dtype)
        acc_sc[...] = jnp.zeros(acc_sc.shape, acc_sc.dtype)

    def process(masked):
        q = q_ref[0]                       # (H, tq, D) bf16 (pre-scaled)
        k = k_ref[0]                       # (H, tk, D) bf16
        v = v_ref[0]                       # (H, tk, D) bf16
        s = jnp.einsum('hqd,hkd->hqk', q, k,
                       preferred_element_type=jnp.float32)      # (H, tq, tk)
        if masked:
            # Diagonal tile only: local causal mask (tq == tk, same start).
            row = jax.lax.broadcasted_iota(jnp.int32, (tq, tk), 0)
            col = jax.lax.broadcasted_iota(jnp.int32, (tq, tk), 1)
            s = jnp.where(col <= row, s, jnp.float32(-10000.0))
        m_prev = m_sc[...]
        m_new = jnp.maximum(m_prev, jnp.max(s, axis=-1, keepdims=True))
        alpha = jnp.exp(m_prev - m_new)
        p = jnp.exp(s - m_new)
        l_sc[...] = alpha * l_sc[...] + jnp.sum(p, axis=-1, keepdims=True)
        acc_sc[...] = alpha * acc_sc[...] + jnp.einsum(
            'hqk,hkd->hqd', p.astype(v.dtype), v,
            preferred_element_type=jnp.float32)
        m_sc[...] = m_new

    # Fully-visible tiles: no mask work at all.
    @pl.when(ki < qi)
    def _():
        process(masked=False)

    # Diagonal tile: apply the causal mask. (ki > qi: nothing runs; its K/V
    # index map is clamped so no DMA was issued either.)
    @pl.when(ki == qi)
    def _():
        process(masked=True)

    @pl.when(ki == pl.num_programs(2) - 1)
    def _():
        inv_l = pl.reciprocal(l_sc[...], approx=True)            # EUP slot
        o = acc_sc[...] * inv_l                                  # (H, tq, D) f32
        # Merge heads with a lane concat -> (tq, E), then ONE E-deep matmul.
        o2 = jnp.concatenate([o[h] for h in range(num_heads)], axis=-1)
        o2 = o2.astype(jnp.bfloat16)
        y = jnp.dot(o2, wproj_ref[...], preferred_element_type=jnp.float32)
        y = y + bproj_ref[...]                                   # (tq, E)
        out_ref[0] = y.astype(out_ref.dtype)


def student_gpt2_attention(hidden, c_attn_w, c_attn_b, c_proj_w, c_proj_b,
                           num_heads, *, scale_attn_weights=True):
    B, T, E = hidden.shape
    H = num_heads
    D = E // H

    # ---- dtype / layout prep (XLA-side, cheap) ----
    # Fold 1/sqrt(D) into the Q third of the generated c_attn weight & bias.
    scale = (1.0 / math.sqrt(D)) if scale_attn_weights else 1.0
    scale_vec = jnp.concatenate([jnp.full((E,), scale, jnp.float32),
                                 jnp.ones((2 * E,), jnp.float32)])
    wqkv_t = (c_attn_w.T.astype(jnp.float32) * scale_vec[None, :]
              ).astype(jnp.bfloat16)                              # (E, 3E)
    bqkv = (c_attn_b.astype(jnp.float32) * scale_vec).reshape(1, 3 * E)
    wproj = c_proj_w.T.astype(jnp.bfloat16)                       # (E, E)
    bproj = c_proj_b.reshape(1, E).astype(jnp.float32)
    hidden_bf = hidden.astype(jnp.bfloat16)

    # ---- QKV projection kernel (head-major outputs, no HBM transpose) ----
    row_tile = _pick_tile(T, 512)
    q, k, v = qkv_projection_head_major(hidden_bf, wqkv_t, bqkv,
                                        num_heads=H, head_dim=D,
                                        row_tile=row_tile)        # (B,H,T,D) bf16

    # ---- flash attention + fused output projection ----
    t_attn = _pick_tile(T, _attn_tile_target())   # tq == tk
    n_t = T // t_attn

    kernel = functools.partial(flash_attn_proj_kernel,
                               num_heads=H, tq=t_attn, tk=t_attn)
    qkv_block = pl.BlockSpec((1, H, t_attn, D), lambda b, qi, ki: (b, 0, qi, 0))
    # K/V index maps clamped to the causal bound: skipped (future) kv steps map
    # to the same block index as the previous step -> no DMA issued for them.
    kv_block = pl.BlockSpec((1, H, t_attn, D),
                            lambda b, qi, ki: (b, 0, jnp.minimum(ki, qi), 0))

    return pl.pallas_call(
        kernel,
        grid=(B, n_t, n_t),
        in_specs=[
            qkv_block,                                            # Q
            kv_block,                                             # K
            kv_block,                                             # V
            pl.BlockSpec((E, E), lambda b, qi, ki: (0, 0)),       # wproj
            pl.BlockSpec((1, E), lambda b, qi, ki: (0, 0)),       # bproj
        ],
        out_specs=pl.BlockSpec((1, t_attn, E), lambda b, qi, ki: (b, qi, 0)),
        out_shape=jax.ShapeDtypeStruct((B, T, E), jnp.float32),
        scratch_shapes=[
            pltpu.VMEM((H, t_attn, 1), jnp.float32),   # running max
            pltpu.VMEM((H, t_attn, 1), jnp.float32),   # running denom
            pltpu.VMEM((H, t_attn, D), jnp.float32),   # running PV accumulator
        ],
        compiler_params=pltpu.CompilerParams(
            dimension_semantics=("parallel", "parallel", "arbitrary"),
            vmem_limit_bytes=_attn_vmem_bytes(H, D, E, t_attn)),
    )(q, k, v, wproj, bproj)


# ---------------------------------------------------------------------------
# Pure-JAX f32 reference (mirrors the PyTorch forward) for validation
# ---------------------------------------------------------------------------
def reference_forward(hidden, c_attn_w, c_attn_b, c_proj_w, c_proj_b, num_heads):
    B, T, E = hidden.shape
    D = E // num_heads
    qkv = hidden @ c_attn_w.T + c_attn_b
    q, k, v = jnp.split(qkv, 3, axis=-1)

    def split_heads(t):
        return t.reshape(B, T, num_heads, D).transpose(0, 2, 1, 3)

    q, k, v = map(split_heads, (q, k, v))
    s = jnp.einsum('bhqd,bhkd->bhqk', q, k) / math.sqrt(D)
    mask = jnp.tril(jnp.ones((T, T), dtype=bool))
    s = jnp.where(mask, s, jnp.float32(-10000.0))
    p = jax.nn.softmax(s, axis=-1)
    o = jnp.einsum('bhqk,bhkd->bhqd', p, v)
    o = o.transpose(0, 2, 1, 3).reshape(B, T, E)
    return o @ c_proj_w.T + c_proj_b


def xavier_uniform(key, shape):
    fan_in, fan_out = shape[1], shape[0]
    bound = math.sqrt(6.0 / (fan_in + fan_out))
    return jax.random.uniform(key, shape, jnp.float32, -bound, bound)


if __name__ == "__main__":
    # config: hidden_size=32, num_heads=4, seq=8, batch=2
    B, T, E, H = 2, 8, 32, 4
    # teacher has 8 decoder layers, student has 4 -> 2 adjacent teacher layers
    L = 2

    key = jax.random.PRNGKey(0)
    keys = jax.random.split(key, 16)

    # Synthetic teacher weight/bias groups (already sliced to the L adjacent
    # layers for this student layer).
    subset_attn_w = jax.random.normal(keys[0], (3 * E, E, L), jnp.float32) * 0.1
    subset_attn_b = jax.random.normal(keys[1], (3 * E, L), jnp.float32) * 0.1
    subset_proj_w = jax.random.normal(keys[2], (E, E, L), jnp.float32) * 0.1
    subset_proj_b = jax.random.normal(keys[3], (E, L), jnp.float32) * 0.1

    # W_l parameters (xavier_uniform as in the module init)
    wl_attn_w = xavier_uniform(keys[4], (L, 1))
    wl_attn_b = xavier_uniform(keys[5], (L, 1))
    wl_proj_w = xavier_uniform(keys[6], (L, 1))
    wl_proj_b = xavier_uniform(keys[7], (L, 1))

    # Non-trivial W / B (module inits to ones/zeros but they are trainable, so
    # exercise the general tanh(acc)*W + B path and validate it).
    def near_ones(k, shape):
        return 1.0 + 0.05 * jax.random.normal(k, shape, jnp.float32)

    def near_zeros(k, shape):
        return 0.05 * jax.random.normal(k, shape, jnp.float32)

    # --- generate student parameters with the Pallas hypernetwork kernel ---
    def gen_weight(subset_oil, wl, W, Bp):
        s = jnp.transpose(subset_oil, (2, 0, 1))          # (L, O, I)
        return generate_student_param(s, wl, W, Bp)

    def gen_bias(subset_ol, wl, W, Bp):
        # lane-dense layout: O sits on the 128-lane axis -> (L, 1, O)
        s = jnp.transpose(subset_ol, (1, 0))[:, None, :]  # (L, 1, O)
        return generate_student_param(s, wl, W[None, :], Bp[None, :])[0]

    W_aw, B_aw = near_ones(keys[8], (3 * E, E)), near_zeros(keys[9], (3 * E, E))
    W_ab, B_ab = near_ones(keys[10], (3 * E,)), near_zeros(keys[11], (3 * E,))
    W_pw, B_pw = near_ones(keys[12], (E, E)), near_zeros(keys[13], (E, E))
    W_pb, B_pb = near_ones(keys[14], (E,)), near_zeros(keys[15], (E,))

    c_attn_w = gen_weight(subset_attn_w, wl_attn_w, W_aw, B_aw)   # (3E, E)
    c_attn_b = gen_bias(subset_attn_b, wl_attn_b, W_ab, B_ab)     # (3E,)
    c_proj_w = gen_weight(subset_proj_w, wl_proj_w, W_pw, B_pw)   # (E, E)
    c_proj_b = gen_bias(subset_proj_b, wl_proj_b, W_pb, B_pb)     # (E,)

    # check the hypernetwork kernel (general W/B path) against plain JAX
    ref_w = jnp.tanh(jnp.einsum('oil,lk->oik', subset_attn_w,
                                wl_attn_w)[..., 0]) * W_aw + B_aw
    ref_b = jnp.tanh(jnp.einsum('ol,lk->ok', subset_attn_b,
                                wl_attn_b)[..., 0]) * W_ab + B_ab
    np.testing.assert_allclose(np.asarray(c_attn_w), np.asarray(ref_w),
                               rtol=1e-5, atol=1e-5)
    np.testing.assert_allclose(np.asarray(c_attn_b), np.asarray(ref_b),
                               rtol=1e-5, atol=1e-5)

    # --- run the attention pipeline (bf16 MXU path) ---
    hidden = jax.random.normal(jax.random.PRNGKey(42), (B, T, E), jnp.float32)
    out = student_gpt2_attention(hidden, c_attn_w, c_attn_b,
                                 c_proj_w, c_proj_b, num_heads=H)
    out = jax.block_until_ready(out)

    ref = reference_forward(hidden, c_attn_w, c_attn_b, c_proj_w, c_proj_b, H)
    # tolerance sized for bf16 MXU operands vs an f32 reference
    np.testing.assert_allclose(np.asarray(out), np.asarray(ref),
                               rtol=5e-2, atol=5e-2)

    print("KERNEL_OK")
</pallas_src>

<mosaic_0001>
module attributes {stable_mosaic.version = 11 : i64} {
  func.func @gen_param_kernel(%arg0: i32, %arg1: memref<2x96x32xf32, #tpu.memory_space<vmem>>, %arg2: memref<2x1xf32, #tpu.memory_space<vmem>>, %arg3: memref<96x32xf32, #tpu.memory_space<vmem>>, %arg4: memref<96x32xf32, #tpu.memory_space<vmem>>, %arg5: memref<96x32xf32, #tpu.memory_space<vmem>>) attributes {dimension_semantics = [#tpu.dimension_semantics<parallel>], iteration_bounds = array<i64: 1>, scalar_prefetch = 0 : i64, scratch_operands = 0 : i64, tpu.core_type = #tpu.core_type<tc>, window_params = [{transform_indices = @transform_0, window_bounds = array<i64: 2, 96, 32>}, {pipeline_mode = #tpu.pipeline_mode<synchronous>, transform_indices = @transform_1, window_bounds = array<i64: 2, 1>}, {transform_indices = @transform_2, window_bounds = array<i64: 96, 32>}, {transform_indices = @transform_3, window_bounds = array<i64: 96, 32>}, {transform_indices = @transform_4, window_bounds = array<i64: 96, 32>}]} {
    %c0 = arith.constant 0 : index
    %c0_0 = arith.constant 0 : index
    %c0_1 = arith.constant 0 : index
    %0 = vector.load %arg1[%c0, %c0_0, %c0_1] : memref<2x96x32xf32, #tpu.memory_space<vmem>>, vector<2x96x32xf32>
    %c0_2 = arith.constant 0 : index
    %c0_3 = arith.constant 0 : index
    %1 = vector.load %arg2[%c0_2, %c0_3] : memref<2x1xf32, #tpu.memory_space<vmem>>, vector<2x1xf32>
    %2 = vector.shape_cast %1 : vector<2x1xf32> to vector<2x1x1xf32>
    %3 = vector.broadcast %2 : vector<2x1x1xf32> to vector<2x96x32xf32>
    %4 = arith.mulf %0, %3 : vector<2x96x32xf32>
    %cst = arith.constant dense<0.000000e+00> : vector<96x32xf32>
    %5 = vector.multi_reduction <add>, %4, %cst [0] : vector<2x96x32xf32> to vector<96x32xf32>
    %6 = math.tanh %5 : vector<96x32xf32>
    %c0_4 = arith.constant 0 : index
    %c0_5 = arith.constant 0 : index
    %7 = vector.load %arg3[%c0_4, %c0_5] : memref<96x32xf32, #tpu.memory_space<vmem>>, vector<96x32xf32>
    %8 = arith.mulf %6, %7 : vector<96x32xf32>
    %c0_6 = arith.constant 0 : index
    %c0_7 = arith.constant 0 : index
    %9 = vector.load %arg4[%c0_6, %c0_7] : memref<96x32xf32, #tpu.memory_space<vmem>>, vector<96x32xf32>
    %10 = arith.addf %8, %9 : vector<96x32xf32>
    %c0_8 = arith.constant 0 : index
    %c0_9 = arith.constant 0 : index
    %11 = vector.load %arg5[%c0_8, %c0_9] : memref<96x32xf32, #tpu.memory_space<vmem>>, vector<96x32xf32>
    tpu.vector_store %arg5[%c0_8, %c0_9], %10 {strides = array<i32>} : memref<96x32xf32, #tpu.memory_space<vmem>>, vector<96x32xf32>,
    return
  }
  func.func @transform_0(%arg0: i32) -> (i32, i32, i32) {
    %c0_i32 = arith.constant 0 : i32
    %c0_i32_0 = arith.constant 0 : i32
    %c0_i32_1 = arith.constant 0 : i32
    return %c0_i32, %arg0, %c0_i32_0 : i32, i32, i32
  }
  func.func @transform_1(%arg0: i32) -> (i32, i32) {
    %c0_i32 = arith.constant 0 : i32
    %c0_i32_0 = arith.constant 0 : i32
    %c0_i32_1 = arith.constant 0 : i32
    return %c0_i32, %c0_i32_0 : i32, i32
  }
  func.func @transform_2(%arg0: i32) -> (i32, i32) {
    %c0_i32 = arith.constant 0 : i32
    %c0_i32_0 = arith.constant 0 : i32
    return %arg0, %c0_i32 : i32, i32
  }
  func.func @transform_3(%arg0: i32) -> (i32, i32) {
    %c0_i32 = arith.constant 0 : i32
    %c0_i32_0 = arith.constant 0 : i32
    return %arg0, %c0_i32 : i32, i32
  }
  func.func @transform_4(%arg0: i32) -> (i32, i32) {
    %c0_i32 = arith.constant 0 : i32
    %c0_i32_0 = arith.constant 0 : i32
    return %arg0, %c0_i32 : i32, i32
  }
}

</mosaic_0001>

<llo_original>
// kernel: tpu_custom_call.1
$region0: #{tpu_custom_call.1}
  #allocation0 [shape = 'u32[]', space=smem, size = 0x4, offset = 0x4, fixed_abs, tag = 'smem constant byte address 0x4 - core index']
  #allocation1 [shape = 'u32[144,128]{1,0:T(1,128)}', space=vmem, size = 0x12000, scoped, tag = 'internal scratch']
  %s0 = inlined_call_operand.vmem [shape: f32[2,96,32], index: 0, kind: input, shape index: {}]
  %s1 = inlined_call_operand.vmem [shape: f32[2,1], index: 1, kind: input, shape index: {}]
  %s2 = inlined_call_operand.vmem [shape: f32[96,32], index: 2, kind: input, shape index: {}]
  %s3 = inlined_call_operand.vmem [shape: f32[96,32], index: 3, kind: input, shape index: {}]
  %s4 = inlined_call_operand.vmem [shape: f32[96,32], index: 4, kind: output, shape index: {}]
  %s5 = sld [smem:[#allocation0]]
  $region26: #{tpu_custom_call.1} parent=0
    _
  %s7 = ssub.s32 1, %s5
  %s8 = scalar_select 0, %s7, %s5
  // Predicated region
  $region2: #{tpu_custom_call.1} parent=0 // pred_check
    _
  $region3: #{tpu_custom_call.1} parent=0 // pred_check_branch
    %10 = sbr.rel (0) target = $region5
  $region4: #{tpu_custom_call.1} parent=0 // pred_region
    _
  $region5: #{tpu_custom_call.1} parent=0 // pred_fallthru
    _
  // Predicated region
  $region6: #{tpu_custom_call.1} parent=0 // pred_check
    _
  $region7: #{tpu_custom_call.1} parent=0 // pred_check_branch
    %12 = sbr.rel (0) target = $region9
  $region8: #{tpu_custom_call.1} parent=0 // pred_region
    _
  $region9: #{tpu_custom_call.1} parent=0 // pred_fallthru
    _
  // Predicated region
  $region10: #{tpu_custom_call.1} parent=0 // pred_check
    _
  $region11: #{tpu_custom_call.1} parent=0 // pred_check_branch
    %14 = sbr.rel (0) target = $region13
  $region12: #{tpu_custom_call.1} parent=0 // pred_region
    _
  $region13: #{tpu_custom_call.1} parent=0 // pred_fallthru
    _
  // Predicated region
  $region14: #{tpu_custom_call.1} parent=0 // pred_check
    _
  $region15: #{tpu_custom_call.1} parent=0 // pred_check_branch
    %16 = sbr.rel (0) target = $region17
  $region16: #{tpu_custom_call.1} parent=0 // pred_region
    _
  $region17: #{tpu_custom_call.1} parent=0 // pred_fallthru
    _
  %v17 = vld [vmem:[%s0] sm:$0xff]
  %v18 = vld [vmem:[%s0 + $0x8] sm:$0xff]
  %v19 = vld [vmem:[%s0 + $0x10] sm:$0xff]
  %v20 = vld [vmem:[%s0 + $0x18] sm:$0xff]
  %v21 = vld [vmem:[%s0 + $0x20] sm:$0xff]
  %v22 = vld [vmem:[%s0 + $0x28] sm:$0xff]
  %v23 = vld [vmem:[%s0 + $0x30] sm:$0xff]
  %v24 = vld [vmem:[%s0 + $0x38] sm:$0xff]
  %v25 = vld [vmem:[%s0 + $0x40] sm:$0xff]
  %v26 = vld [vmem:[%s0 + $0x48] sm:$0xff]
  %v27 = vld [vmem:[%s0 + $0x50] sm:$0xff]
  %v28 = vld [vmem:[%s0 + $0x58] sm:$0xff]
  %v29 = vld [vmem:[%s0 + $0x60] sm:$0xff]
  %v30 = vld [vmem:[%s0 + $0x68] sm:$0xff]
  %v31 = vld [vmem:[%s0 + $0x70] sm:$0xff]
  %v32 = vld [vmem:[%s0 + $0x78] sm:$0xff]
  %v33 = vld [vmem:[%s0 + $0x80] sm:$0xff]
  %v34 = vld [vmem:[%s0 + $0x88] sm:$0xff]
  %v35 = vld [vmem:[%s0 + $0x90] sm:$0xff]
  %v36 = vld [vmem:[%s0 + $0x98] sm:$0xff]
  %v37 = vld [vmem:[%s0 + $0xa0] sm:$0xff]
  %v38 = vld [vmem:[%s0 + $0xa8] sm:$0xff]
  %v39 = vld [vmem:[%s0 + $0xb0] sm:$0xff]
  %v40 = vld [vmem:[%s0 + $0xb8] sm:$0xff]
  %v41 = vld [vmem:[%s1] sm:$0x3]
  %v44 = vunpack.c.l.s4 1966171168
  %v45 = vunpack.c.0.s8 %v44
  %v46 = vlaneseq
  %v47 = vshrl.u32 %v46, 7
  %v48 = vsub.s32 %v45, %v47
  %v49 = vrot.slane %v41, %v48
  %v50 = vcombine.high %v49, %v49
  %v52 = vunpack.c.l.s4 1966171168
  %v53 = vunpack.c.0.s8 %v52
  %v54 = vlaneseq
  %v55 = vshrl.u32 %v54, 7
  %v56 = vsub.s32 %v53, %v55
  %v57 = vrot.slane %v49, %v56
  %v59 = vunpack.c.l.s4 1966171168
  %v60 = vunpack.c.0.s8 %v59
  %v61 = vlaneseq
  %v62 = vshrl.u32 %v61, 7
  %v63 = vsub.s32 %v60, %v62
  %v64 = vrot.slane %v50, %v63
  %v65 = vlaneseq
  %v66 = vshrl.u32 %v65, 7
  %v67 = vsub.s32 0, %v66
  %v68 = vrot.slane %v57, %v67
  %v69 = vlaneseq
  %v70 = vshrl.u32 %v69, 7
  %v71 = vsub.s32 0, %v70
  %v72 = vrot.slane %v64, %v71
  %73 = vset.pattern.permute.xlu0 0
  %74 = vperm.xlu0 %73, %v68
  %v75 = vpop.permute.xlu0 %74
  %77 = vset.pattern.permute.xlu0 0
  %78 = vperm.xlu0 %77, %v72
  %v79 = vpop.permute.xlu0 %78
  %v81 = vmul.f32 %v17, %v75
  %v82 = vmul.f32 %v18, %v75
  %v83 = vmul.f32 %v19, %v75
  %v84 = vmul.f32 %v20, %v75
  %v85 = vmul.f32 %v21, %v75
  %v86 = vmul.f32 %v22, %v75
  %v87 = vmul.f32 %v23, %v75
  %v88 = vmul.f32 %v24, %v75
  %v89 = vmul.f32 %v25, %v75
  %v90 = vmul.f32 %v26, %v75
  %v91 = vmul.f32 %v27, %v75
  %v92 = vmul.f32 %v28, %v75
  %v93 = vmul.f32 %v29, %v79
  %v94 = vmul.f32 %v30, %v79
  %v95 = vmul.f32 %v31, %v79
  %v96 = vmul.f32 %v32, %v79
  %v97 = vmul.f32 %v33, %v79
  %v98 = vmul.f32 %v34, %v79
  %v99 = vmul.f32 %v35, %v79
  %v100 = vmul.f32 %v36, %v79
  %v101 = vmul.f32 %v37, %v79
  %v102 = vmul.f32 %v38, %v79
  %v103 = vmul.f32 %v39, %v79
  %v104 = vmul.f32 %v40, %v79
  %vm105 = vcmask 261120
  %v106 = vsel %vm105, %v81, 0.0
  %v107 = vsel %vm105, %v93, 0.0
  %v108 = vadd.f32 %v106, %v107
  %v109 = vsel %vm105, %v82, 0.0
  %v110 = vsel %vm105, %v94, 0.0
  %v111 = vadd.f32 %v109, %v110
  %v112 = vsel %vm105, %v83, 0.0
  %v113 = vsel %vm105, %v95, 0.0
  %v114 = vadd.f32 %v112, %v113
  %v115 = vsel %vm105, %v84, 0.0
  %v116 = vsel %vm105, %v96, 0.0
  %v117 = vadd.f32 %v115, %v116
  %v118 = vsel %vm105, %v85, 0.0
  %v119 = vsel %vm105, %v97, 0.0
  %v120 = vadd.f32 %v118, %v119
  %v121 = vsel %vm105, %v86, 0.0
  %v122 = vsel %vm105, %v98, 0.0
  %v123 = vadd.f32 %v121, %v122
  %v124 = vsel %vm105, %v87, 0.0
  %v125 = vsel %vm105, %v99, 0.0
  %v126 = vadd.f32 %v124, %v125
  %v127 = vsel %vm105, %v88, 0.0
  %v128 = vsel %vm105, %v100, 0.0
  %v129 = vadd.f32 %v127, %v128
  %v130 = vsel %vm105, %v89, 0.0
  %v131 = vsel %vm105, %v101, 0.0
  %v132 = vadd.f32 %v130, %v131
  %v133 = vsel %vm105, %v90, 0.0
  %v134 = vsel %vm105, %v102, 0.0
  %v135 = vadd.f32 %v133, %v134
  %v136 = vsel %vm105, %v91, 0.0
  %v137 = vsel %vm105, %v103, 0.0
  %v138 = vadd.f32 %v136, %v137
  %v139 = vsel %vm105, %v92, 0.0
  %v140 = vsel %vm105, %v104, 0.0
  %v141 = vadd.f32 %v139, %v140
  %v142 = vtanh.pop %v108
  %v143 = vtanh.pop %v111
  %v144 = vtanh.pop %v114
  %v145 = vtanh.pop %v117
  %v146 = vtanh.pop %v120
  %v147 = vtanh.pop %v123
  %v148 = vtanh.pop %v126
  %v149 = vtanh.pop %v129
  %v150 = vtanh.pop %v132
  %v151 = vtanh.pop %v135
  %v152 = vtanh.pop %v138
  %v153 = vtanh.pop %v141
  %v154 = vld [vmem:[%s2] sm:$0xff]
  %v155 = vld [vmem:[%s2 + $0x8] sm:$0xff]
  %v156 = vld [vmem:[%s2 + $0x10] sm:$0xff]
  %v157 = vld [vmem:[%s2 + $0x18] sm:$0xff]
  %v158 = vld [vmem:[%s2 + $0x20] sm:$0xff]
  %v159 = vld [vmem:[%s2 + $0x28] sm:$0xff]
  %v160 = vld [vmem:[%s2 + $0x30] sm:$0xff]
  %v161 = vld [vmem:[%s2 + $0x38] sm:$0xff]
  %v162 = vld [vmem:[%s2 + $0x40] sm:$0xff]
  %v163 = vld [vmem:[%s2 + $0x48] sm:$0xff]
  %v164 = vld [vmem:[%s2 + $0x50] sm:$0xff]
  %v165 = vld [vmem:[%s2 + $0x58] sm:$0xff]
  %v166 = vmul.f32 %v142, %v154
  %v167 = vmul.f32 %v143, %v155
  %v168 = vmul.f32 %v144, %v156
  %v169 = vmul.f32 %v145, %v157
  %v170 = vmul.f32 %v146, %v158
  %v171 = vmul.f32 %v147, %v159
  %v172 = vmul.f32 %v148, %v160
  %v173 = vmul.f32 %v149, %v161
  %v174 = vmul.f32 %v150, %v162
  %v175 = vmul.f32 %v151, %v163
  %v176 = vmul.f32 %v152, %v164
  %v177 = vmul.f32 %v153, %v165
  %v178 = vld [vmem:[%s3] sm:$0xff]
  %v179 = vld [vmem:[%s3 + $0x8] sm:$0xff]
  %v180 = vld [vmem:[%s3 + $0x10] sm:$0xff]
  %v181 = vld [vmem:[%s3 + $0x18] sm:$0xff]
  %v182 = vld [vmem:[%s3 + $0x20] sm:$0xff]
  %v183 = vld [vmem:[%s3 + $0x28] sm:$0xff]
  %v184 = vld [vmem:[%s3 + $0x30] sm:$0xff]
  %v185 = vld [vmem:[%s3 + $0x38] sm:$0xff]
  %v186 = vld [vmem:[%s3 + $0x40] sm:$0xff]
  %v187 = vld [vmem:[%s3 + $0x48] sm:$0xff]
  %v188 = vld [vmem:[%s3 + $0x50] sm:$0xff]
  %v189 = vld [vmem:[%s3 + $0x58] sm:$0xff]
  %v190 = vadd.f32 %v166, %v178
  %v191 = vadd.f32 %v167, %v179
  %v192 = vadd.f32 %v168, %v180
  %v193 = vadd.f32 %v169, %v181
  %v194 = vadd.f32 %v170, %v182
  %v195 = vadd.f32 %v171, %v183
  %v196 = vadd.f32 %v172, %v184
  %v197 = vadd.f32 %v173, %v185
  %v198 = vadd.f32 %v174, %v186
  %v199 = vadd.f32 %v175, %v187
  %v200 = vadd.f32 %v176, %v188
  %v201 = vadd.f32 %v177, %v189
  %202 = vst.msk [vmem:[%s4] sm:$0xff] %vm105, %v190
  %203 = vst.msk [vmem:[%s4 + $0x8] sm:$0xff] %vm105, %v191
  %204 = vst.msk [vmem:[%s4 + $0x10] sm:$0xff] %vm105, %v192
  %205 = vst.msk [vmem:[%s4 + $0x18] sm:$0xff] %vm105, %v193
  %206 = vst.msk [vmem:[%s4 + $0x20] sm:$0xff] %vm105, %v194
  %207 = vst.msk [vmem:[%s4 + $0x28] sm:$0xff] %vm105, %v195
  %208 = vst.msk [vmem:[%s4 + $0x30] sm:$0xff] %vm105, %v196
  %209 = vst.msk [vmem:[%s4 + $0x38] sm:$0xff] %vm105, %v197
  %210 = vst.msk [vmem:[%s4 + $0x40] sm:$0xff] %vm105, %v198
  %211 = vst.msk [vmem:[%s4 + $0x48] sm:$0xff] %vm105, %v199
  %212 = vst.msk [vmem:[%s4 + $0x50] sm:$0xff] %vm105, %v200
  %213 = vst.msk [vmem:[%s4 + $0x58] sm:$0xff] %vm105, %v201
  // Predicated region
  $region18: #{tpu_custom_call.1} parent=0 // pred_check
    _
  $region19: #{tpu_custom_call.1} parent=0 // pred_check_branch
    %215 = sbr.rel (0) target = $region21
  $region20: #{tpu_custom_call.1} parent=0 // pred_region
    _
  $region21: #{tpu_custom_call.1} parent=0 // pred_fallthru
    _
  // Predicated region
  $region22: #{tpu_custom_call.1} parent=0 // pred_check
    _
  $region23: #{tpu_custom_call.1} parent=0 // pred_check_branch
    %217 = sbr.rel (0) target = $region25
  $region24: #{tpu_custom_call.1} parent=0 // pred_region
    _
  $region25: #{tpu_custom_call.1} parent=0 // pred_fallthru
    _

</llo_original>
